<compile_context>
chip_gen: v5e
topology: v5e:2x2
jax: 0.10.0
libtpu: 0.0.40
codegen_flags: <defaults>
</compile_context>

<pallas_src>
import functools

import jax
import jax.numpy as jnp
from jax import lax
from jax.experimental import pallas as pl
from jax.experimental.pallas import tpu as pltpu

OUT_DIM = 12          # learner_config['out_dim'] (OOD_heads default num_classes)
FEAT_DIM = 768        # OOD_heads input_size used by NormalNN.__init__
TEMP = 0.05           # OOD_heads temp
INV_TEMP = 1.0 / TEMP
EPS = 1e-12           # F.normalize default eps

LANE = 128
SUBLANE = 8


def _round_up(x, m):
    return ((x + m - 1) // m) * m


def _ood_head_kernel(z_ref, wt_ref, o_ref):
    """Per batch-tile: raw logits on the MXU, then a fused per-row scale.

    Row normalization commutes with the matmul, so instead of dividing the
    (TB, 768) activations we scale the (TB, O_pad) logits by
    rsqrt(max(||z||^2, eps^2)) / temp  (rsqrt runs on the EUP slot).
    """
    z = z_ref[...]                                              # (TB, D), native dtype
    # Weight is pre-transposed to (D, O_pad) in the wrapper -> no in-kernel .T
    raw = jnp.dot(z, wt_ref[...], preferred_element_type=jnp.float32)  # (TB, O_pad)
    zf = z.astype(jnp.float32)
    sq = jnp.sum(zf * zf, axis=-1, keepdims=True)               # (TB, 1)
    # 1 / max(||z||, eps) == rsqrt(max(||z||^2, eps^2))
    scale = lax.rsqrt(jnp.maximum(sq, EPS * EPS)) * INV_TEMP
    o_ref[...] = (raw * scale).astype(o_ref.dtype)


@functools.partial(jax.jit, static_argnames=("block_b",))
def ood_heads_forward(z, w, *, block_b=512):
    """OOD_heads.forward(z) with norm=True.

    z: (B, 768) latent (f32 or bf16); w: (2*out_dim, 768) PyTorch Linear weight.
    Returns f32 logits of shape (B, 2*out_dim).
    """
    B, D = z.shape
    O, D2 = w.shape
    assert D == D2

    # --- hoisted weight prep (one-time, outside the kernel) -----------------
    # Pad output dim to a lane multiple (unmasked lane-dense stores, full MXU N)
    # and transpose once so the kernel contracts last-axis vs first-axis.
    o_pad = _round_up(O, LANE)
    w = w.astype(z.dtype)
    if o_pad != O:
        w = jnp.pad(w, ((0, o_pad - O), (0, 0)))
    wt = w.T                                                    # (D, o_pad)

    # --- ragged batch: clamp tile to batch, pad B to a tile multiple --------
    bb = max(SUBLANE, min(_round_up(B, SUBLANE), _round_up(block_b, SUBLANE)))
    b_pad = _round_up(B, bb)
    if b_pad != B:
        z = jnp.pad(z, ((0, b_pad - B), (0, 0)))                # zero rows -> zero logits
    grid = (b_pad // bb,)

    out = pl.pallas_call(
        _ood_head_kernel,
        out_shape=jax.ShapeDtypeStruct((b_pad, o_pad), jnp.float32),
        grid_spec=pltpu.PrefetchScalarGridSpec(
            num_scalar_prefetch=0,
            grid=grid,
            in_specs=[
                pl.BlockSpec((bb, D), lambda i: (i, 0)),        # z tile (streamed)
                pl.BlockSpec((D, o_pad), lambda i: (0, 0)),     # full weight, resident
            ],
            out_specs=pl.BlockSpec((bb, o_pad), lambda i: (i, 0)),
        ),
        compiler_params=pltpu.CompilerParams(
            # batch axis is embarrassingly parallel -> shards across TCs (v7x)
            dimension_semantics=("parallel",),
        ),
    )(z, wt)
    return out[:B, :O]


def normalnn_forward(z, w_ood, valid_out_dim, *, block_b=512):
    """NormalNN-style forward on latent z.

    Returns (ood_logits_sliced, latent).  The slice `[:, :valid_out_dim]`
    mirrors NormalNN.forward's `out = out[:, :self.valid_out_dim]`.
    """
    out = ood_heads_forward(z, w_ood, block_b=block_b)
    return out[:, :valid_out_dim], z


def _reference(z, w):
    zf = z.astype(jnp.float32)
    wf = w.astype(jnp.float32)
    zn = zf / jnp.maximum(jnp.linalg.norm(zf, axis=1, keepdims=True), EPS)
    return jnp.dot(zn, wf.T, precision=lax.Precision.HIGHEST) / TEMP


if __name__ == "__main__":
    key = jax.random.PRNGKey(0)
    k_z, k_w, k_z2 = jax.random.split(key, 3)

    # --- test 1: small f32 batch (module-consistent shapes) -----------------
    B = 8
    z = jax.random.normal(k_z, (B, FEAT_DIM), dtype=jnp.float32)
    bound = 1.0 / (FEAT_DIM ** 0.5)
    w_ood = jax.random.uniform(
        k_w, (2 * OUT_DIM, FEAT_DIM), minval=-bound, maxval=bound, dtype=jnp.float32
    )
    valid_out_dim = OUT_DIM  # e.g. after add_valid_output_dim(OUT_DIM)

    out_sliced, latent = normalnn_forward(z, w_ood, valid_out_dim)
    out_sliced = jax.block_until_ready(out_sliced)
    ref = _reference(z, w_ood)[:, :valid_out_dim]
    assert out_sliced.shape == (B, valid_out_dim)
    assert jnp.allclose(out_sliced, ref, rtol=1e-4, atol=1e-5), \
        float(jnp.max(jnp.abs(out_sliced - ref)))

    # --- test 2: ragged bf16 batch (padding path + multi-step grid) ---------
    B2 = 200
    z2 = jax.random.normal(k_z2, (B2, FEAT_DIM), dtype=jnp.float32).astype(jnp.bfloat16)
    w2 = w_ood.astype(jnp.bfloat16)
    out2 = jax.block_until_ready(ood_heads_forward(z2, w2, block_b=128))
    ref2 = _reference(z2, w2)
    assert out2.shape == (B2, 2 * OUT_DIM)
    assert jnp.allclose(out2, ref2, rtol=1e-3, atol=1e-3), \
        float(jnp.max(jnp.abs(out2 - ref2)))

    print("KERNEL_OK")
</pallas_src>

<mosaic_0001>
module attributes {stable_mosaic.version = 11 : i64} {
  func.func @_ood_head_kernel(%arg0: i32, %arg1: memref<8x768xf32, #tpu.memory_space<vmem>>, %arg2: memref<768x128xf32, #tpu.memory_space<vmem>>, %arg3: memref<8x128xf32, #tpu.memory_space<vmem>>) attributes {dimension_semantics = [#tpu.dimension_semantics<parallel>], iteration_bounds = array<i64: 1>, scalar_prefetch = 0 : i64, scratch_operands = 0 : i64, tpu.core_type = #tpu.core_type<tc>, window_params = [{transform_indices = @transform_0, window_bounds = array<i64: 8, 768>}, {pipeline_mode = #tpu.pipeline_mode<synchronous>, transform_indices = @transform_1, window_bounds = array<i64: 768, 128>}, {transform_indices = @transform_2, window_bounds = array<i64: 8, 128>}]} {
    %c0 = arith.constant 0 : index
    %c0_0 = arith.constant 0 : index
    %0 = vector.load %arg1[%c0, %c0_0] : memref<8x768xf32, #tpu.memory_space<vmem>>, vector<8x768xf32>
    %c0_1 = arith.constant 0 : index
    %c0_2 = arith.constant 0 : index
    %1 = vector.load %arg2[%c0_1, %c0_2] : memref<768x128xf32, #tpu.memory_space<vmem>>, vector<768x128xf32>
    %cst = arith.constant dense<0.000000e+00> : vector<8x128xf32>
    %2 = tpu.matmul %0, %1, %cst {dimension_numbers = #tpu.dot_dimension_numbers<[1], [0], [0], [1], [0, 0, 1, 1], [], []>} : vector<8x768xf32>, vector<768x128xf32>, vector<8x128xf32> -> vector<8x128xf32>
    %3 = arith.mulf %0, %0 : vector<8x768xf32>
    %cst_3 = arith.constant dense<0.000000e+00> : vector<8xf32>
    %4 = vector.multi_reduction <add>, %3, %cst_3 [1] : vector<8x768xf32> to vector<8xf32>
    %5 = vector.shape_cast %4 : vector<8xf32> to vector<8x1xf32>
    %cst_4 = arith.constant 1.000000e-24 : f32
    %6 = vector.broadcast %cst_4 : f32 to vector<8x1xf32>
    %7 = arith.maximumf %5, %6 : vector<8x1xf32>
    %8 = math.rsqrt %7 : vector<8x1xf32>
    %cst_5 = arith.constant 2.000000e+01 : f32
    %9 = vector.broadcast %cst_5 : f32 to vector<8x1xf32>
    %10 = arith.mulf %8, %9 : vector<8x1xf32>
    %11 = vector.broadcast %10 : vector<8x1xf32> to vector<8x128xf32>
    %12 = arith.mulf %2, %11 : vector<8x128xf32>
    %c0_6 = arith.constant 0 : index
    %c0_7 = arith.constant 0 : index
    %13 = vector.load %arg3[%c0_6, %c0_7] : memref<8x128xf32, #tpu.memory_space<vmem>>, vector<8x128xf32>
    tpu.vector_store %arg3[%c0_6, %c0_7], %12 {strides = array<i32>} : memref<8x128xf32, #tpu.memory_space<vmem>>, vector<8x128xf32>,
    return
  }
  func.func @transform_0(%arg0: i32) -> (i32, i32) {
    %c0_i32 = arith.constant 0 : i32
    %c0_i32_0 = arith.constant 0 : i32
    return %arg0, %c0_i32 : i32, i32
  }
  func.func @transform_1(%arg0: i32) -> (i32, i32) {
    %c0_i32 = arith.constant 0 : i32
    %c0_i32_0 = arith.constant 0 : i32
    %c0_i32_1 = arith.constant 0 : i32
    return %c0_i32, %c0_i32_0 : i32, i32
  }
  func.func @transform_2(%arg0: i32) -> (i32, i32) {
    %c0_i32 = arith.constant 0 : i32
    %c0_i32_0 = arith.constant 0 : i32
    return %arg0, %c0_i32 : i32, i32
  }
}

</mosaic_0001>

<llo_original>
// kernel: ood_heads_forward.1
$region0: #{ood_heads_forward.1}
  #allocation0 [shape = 'u32[]', space=smem, size = 0x4, offset = 0x4, fixed_abs, tag = 'smem constant byte address 0x4 - core index']
  #allocation1 [shape = 'u32[72,128]{1,0:T(1,128)}', space=vmem, size = 0x9000, scoped, tag = 'internal scratch']
  %s0 = inlined_call_operand.vmem [shape: f32[8,768], index: 0, kind: input, shape index: {}]
  %s1 = inlined_call_operand.vmem [shape: f32[768,128], index: 1, kind: input, shape index: {}]
  %s2 = inlined_call_operand.hbm [shape: f32[8,128], index: 2, kind: output, shape index: {}]
  %s3 = sld [smem:[#allocation0]]
  $region18: #{ood_heads_forward.1} parent=0
    _
  %s5 = ssub.s32 1, %s3
  %s6 = scalar_select 0, %s5, %s3
  $region1: #{ood_heads_forward.1} parent=0
    #allocation2 [shape = 'u8[4096]{0}', space=vmem, size = 0x1000, scoped, tag = 'output window, operand 0, single buffered']
    #allocation3 [shape = 's32[1]{0}', space=sflag, size = 0x4, scoped, tag = 'scoped memory for ood_heads_forward.1']
    %7 = vsyncpa [#allocation3], 0
    // Predicated region
    $region2: #{ood_heads_forward.1} parent=1 // pred_check
      _
    $region3: #{ood_heads_forward.1} parent=1 // pred_check_branch
      %9 = sbr.rel (0) target = $region5
    $region4: #{ood_heads_forward.1} parent=1 // pred_region
      _
    $region5: #{ood_heads_forward.1} parent=1 // pred_fallthru
      _
    // Predicated region
    $region6: #{ood_heads_forward.1} parent=1 // pred_check
      _
    $region7: #{ood_heads_forward.1} parent=1 // pred_check_branch
      %11 = sbr.rel (0) target = $region9
    $region8: #{ood_heads_forward.1} parent=1 // pred_region
      _
    $region9: #{ood_heads_forward.1} parent=1 // pred_fallthru
      _
    %v12 = vld [vmem:[%s0] sm:$0xff]
    %v13 = vld [vmem:[%s0 + $0x8] sm:$0xff]
    %v14 = vld [vmem:[%s0 + $0x10] sm:$0xff]
    %v15 = vld [vmem:[%s0 + $0x18] sm:$0xff]
    %v16 = vld [vmem:[%s0 + $0x20] sm:$0xff]
    %v17 = vld [vmem:[%s0 + $0x28] sm:$0xff]
    %v18 = vld [vmem:[%s1] sm:$0xff]
    %v19 = vld [vmem:[%s1 + $0x8] sm:$0xff]
    %v20 = vld [vmem:[%s1 + $0x10] sm:$0xff]
    %v21 = vld [vmem:[%s1 + $0x18] sm:$0xff]
    %v22 = vld [vmem:[%s1 + $0x20] sm:$0xff]
    %v23 = vld [vmem:[%s1 + $0x28] sm:$0xff]
    %v24 = vld [vmem:[%s1 + $0x30] sm:$0xff]
    %v25 = vld [vmem:[%s1 + $0x38] sm:$0xff]
    %v26 = vld [vmem:[%s1 + $0x40] sm:$0xff]
    %v27 = vld [vmem:[%s1 + $0x48] sm:$0xff]
    %v28 = vld [vmem:[%s1 + $0x50] sm:$0xff]
    %v29 = vld [vmem:[%s1 + $0x58] sm:$0xff]
    %v30 = vld [vmem:[%s1 + $0x60] sm:$0xff]
    %v31 = vld [vmem:[%s1 + $0x68] sm:$0xff]
    %v32 = vld [vmem:[%s1 + $0x70] sm:$0xff]
    %v33 = vld [vmem:[%s1 + $0x78] sm:$0xff]
    %v34 = vld [vmem:[%s1 + $0x80] sm:$0xff]
    %v35 = vld [vmem:[%s1 + $0x88] sm:$0xff]
    %v36 = vld [vmem:[%s1 + $0x90] sm:$0xff]
    %v37 = vld [vmem:[%s1 + $0x98] sm:$0xff]
    %v38 = vld [vmem:[%s1 + $0xa0] sm:$0xff]
    %v39 = vld [vmem:[%s1 + $0xa8] sm:$0xff]
    %v40 = vld [vmem:[%s1 + $0xb0] sm:$0xff]
    %v41 = vld [vmem:[%s1 + $0xb8] sm:$0xff]
    %v42 = vld [vmem:[%s1 + $0xc0] sm:$0xff]
    %v43 = vld [vmem:[%s1 + $0xc8] sm:$0xff]
    %v44 = vld [vmem:[%s1 + $0xd0] sm:$0xff]
    %v45 = vld [vmem:[%s1 + $0xd8] sm:$0xff]
    %v46 = vld [vmem:[%s1 + $0xe0] sm:$0xff]
    %v47 = vld [vmem:[%s1 + $0xe8] sm:$0xff]
    %v48 = vld [vmem:[%s1 + $0xf0] sm:$0xff]
    %v49 = vld [vmem:[%s1 + $0xf8] sm:$0xff]
    %v50 = vld [vmem:[%s1 + $0x100] sm:$0xff]
    %v51 = vld [vmem:[%s1 + $0x108] sm:$0xff]
    %v52 = vld [vmem:[%s1 + $0x110] sm:$0xff]
    %v53 = vld [vmem:[%s1 + $0x118] sm:$0xff]
    %v54 = vld [vmem:[%s1 + $0x120] sm:$0xff]
    %v55 = vld [vmem:[%s1 + $0x128] sm:$0xff]
    %v56 = vld [vmem:[%s1 + $0x130] sm:$0xff]
    %v57 = vld [vmem:[%s1 + $0x138] sm:$0xff]
    %v58 = vld [vmem:[%s1 + $0x140] sm:$0xff]
    %v59 = vld [vmem:[%s1 + $0x148] sm:$0xff]
    %v60 = vld [vmem:[%s1 + $0x150] sm:$0xff]
    %v61 = vld [vmem:[%s1 + $0x158] sm:$0xff]
    %v62 = vld [vmem:[%s1 + $0x160] sm:$0xff]
    %v63 = vld [vmem:[%s1 + $0x168] sm:$0xff]
    %v64 = vld [vmem:[%s1 + $0x170] sm:$0xff]
    %v65 = vld [vmem:[%s1 + $0x178] sm:$0xff]
    %v66 = vld [vmem:[%s1 + $0x180] sm:$0xff]
    %v67 = vld [vmem:[%s1 + $0x188] sm:$0xff]
    %v68 = vld [vmem:[%s1 + $0x190] sm:$0xff]
    %v69 = vld [vmem:[%s1 + $0x198] sm:$0xff]
    %v70 = vld [vmem:[%s1 + $0x1a0] sm:$0xff]
    %v71 = vld [vmem:[%s1 + $0x1a8] sm:$0xff]
    %v72 = vld [vmem:[%s1 + $0x1b0] sm:$0xff]
    %v73 = vld [vmem:[%s1 + $0x1b8] sm:$0xff]
    %v74 = vld [vmem:[%s1 + $0x1c0] sm:$0xff]
    %v75 = vld [vmem:[%s1 + $0x1c8] sm:$0xff]
    %v76 = vld [vmem:[%s1 + $0x1d0] sm:$0xff]
    %v77 = vld [vmem:[%s1 + $0x1d8] sm:$0xff]
    %v78 = vld [vmem:[%s1 + $0x1e0] sm:$0xff]
    %v79 = vld [vmem:[%s1 + $0x1e8] sm:$0xff]
    %v80 = vld [vmem:[%s1 + $0x1f0] sm:$0xff]
    %v81 = vld [vmem:[%s1 + $0x1f8] sm:$0xff]
    %v82 = vld [vmem:[%s1 + $0x200] sm:$0xff]
    %v83 = vld [vmem:[%s1 + $0x208] sm:$0xff]
    %v84 = vld [vmem:[%s1 + $0x210] sm:$0xff]
    %v85 = vld [vmem:[%s1 + $0x218] sm:$0xff]
    %v86 = vld [vmem:[%s1 + $0x220] sm:$0xff]
    %v87 = vld [vmem:[%s1 + $0x228] sm:$0xff]
    %v88 = vld [vmem:[%s1 + $0x230] sm:$0xff]
    %v89 = vld [vmem:[%s1 + $0x238] sm:$0xff]
    %v90 = vld [vmem:[%s1 + $0x240] sm:$0xff]
    %v91 = vld [vmem:[%s1 + $0x248] sm:$0xff]
    %v92 = vld [vmem:[%s1 + $0x250] sm:$0xff]
    %v93 = vld [vmem:[%s1 + $0x258] sm:$0xff]
    %v94 = vld [vmem:[%s1 + $0x260] sm:$0xff]
    %v95 = vld [vmem:[%s1 + $0x268] sm:$0xff]
    %v96 = vld [vmem:[%s1 + $0x270] sm:$0xff]
    %v97 = vld [vmem:[%s1 + $0x278] sm:$0xff]
    %v98 = vld [vmem:[%s1 + $0x280] sm:$0xff]
    %v99 = vld [vmem:[%s1 + $0x288] sm:$0xff]
    %v100 = vld [vmem:[%s1 + $0x290] sm:$0xff]
    %v101 = vld [vmem:[%s1 + $0x298] sm:$0xff]
    %v102 = vld [vmem:[%s1 + $0x2a0] sm:$0xff]
    %v103 = vld [vmem:[%s1 + $0x2a8] sm:$0xff]
    %v104 = vld [vmem:[%s1 + $0x2b0] sm:$0xff]
    %v105 = vld [vmem:[%s1 + $0x2b8] sm:$0xff]
    %v106 = vld [vmem:[%s1 + $0x2c0] sm:$0xff]
    %v107 = vld [vmem:[%s1 + $0x2c8] sm:$0xff]
    %v108 = vld [vmem:[%s1 + $0x2d0] sm:$0xff]
    %v109 = vld [vmem:[%s1 + $0x2d8] sm:$0xff]
    %v110 = vld [vmem:[%s1 + $0x2e0] sm:$0xff]
    %v111 = vld [vmem:[%s1 + $0x2e8] sm:$0xff]
    %v112 = vld [vmem:[%s1 + $0x2f0] sm:$0xff]
    %v113 = vld [vmem:[%s1 + $0x2f8] sm:$0xff]
    %114 = vmatpush.msra.mxu0 %v33
    %115 = vmatpush.msra.mxu0 %v32
    %116 = vmatpush.msra.mxu0 %v31
    %117 = vmatpush.msra.mxu0 %v30
    %118 = vmatpush.msra.mxu0 %v29
    %119 = vmatpush.msra.mxu0 %v28
    %120 = vmatpush.msra.mxu0 %v27
    %121 = vmatpush.msra.mxu0 %v26
    %122 = vmatpush.msra.mxu0 %v25
    %123 = vmatpush.msra.mxu0 %v24
    %124 = vmatpush.msra.mxu0 %v23
    %125 = vmatpush.msra.mxu0 %v22
    %126 = vmatpush.msra.mxu0 %v21
    %127 = vmatpush.msra.mxu0 %v20
    %128 = vmatpush.msra.mxu0 %v19
    %129 = vmatpush.msra.mxu0 %v18
    %130 = vmatmul.f32.gmra.mxu0 %v12
    %v131 = vpop.f32.mrf.mxu0
    %v132 = vadd.f32 0.0, %v131
    %133 = vdwg.mxu0
    %134 = vmatpush.msra.mxu0 %v49
    %135 = vmatpush.msra.mxu0 %v48
    %136 = vmatpush.msra.mxu0 %v47
    %137 = vmatpush.msra.mxu0 %v46
    %138 = vmatpush.msra.mxu0 %v45
    %139 = vmatpush.msra.mxu0 %v44
    %140 = vmatpush.msra.mxu0 %v43
    %141 = vmatpush.msra.mxu0 %v42
    %142 = vmatpush.msra.mxu0 %v41
    %143 = vmatpush.msra.mxu0 %v40
    %144 = vmatpush.msra.mxu0 %v39
    %145 = vmatpush.msra.mxu0 %v38
    %146 = vmatpush.msra.mxu0 %v37
    %147 = vmatpush.msra.mxu0 %v36
    %148 = vmatpush.msra.mxu0 %v35
    %149 = vmatpush.msra.mxu0 %v34
    %150 = vmatmul.f32.gmra.mxu0 %v13
    %v151 = vpop.f32.mrf.mxu0
    %v152 = vadd.f32 %v132, %v151
    %153 = vdwg.mxu0
    %154 = vmatpush.msra.mxu0 %v65
    %155 = vmatpush.msra.mxu0 %v64
    %156 = vmatpush.msra.mxu0 %v63
    %157 = vmatpush.msra.mxu0 %v62
    %158 = vmatpush.msra.mxu0 %v61
    %159 = vmatpush.msra.mxu0 %v60
    %160 = vmatpush.msra.mxu0 %v59
    %161 = vmatpush.msra.mxu0 %v58
    %162 = vmatpush.msra.mxu0 %v57
    %163 = vmatpush.msra.mxu0 %v56
    %164 = vmatpush.msra.mxu0 %v55
    %165 = vmatpush.msra.mxu0 %v54
    %166 = vmatpush.msra.mxu0 %v53
    %167 = vmatpush.msra.mxu0 %v52
    %168 = vmatpush.msra.mxu0 %v51
    %169 = vmatpush.msra.mxu0 %v50
    %170 = vmatmul.f32.gmra.mxu0 %v14
    %v171 = vpop.f32.mrf.mxu0
    %v172 = vadd.f32 %v152, %v171
    %173 = vdwg.mxu0
    %174 = vmatpush.msra.mxu0 %v81
    %175 = vmatpush.msra.mxu0 %v80
    %176 = vmatpush.msra.mxu0 %v79
    %177 = vmatpush.msra.mxu0 %v78
    %178 = vmatpush.msra.mxu0 %v77
    %179 = vmatpush.msra.mxu0 %v76
    %180 = vmatpush.msra.mxu0 %v75
    %181 = vmatpush.msra.mxu0 %v74
    %182 = vmatpush.msra.mxu0 %v73
    %183 = vmatpush.msra.mxu0 %v72
    %184 = vmatpush.msra.mxu0 %v71
    %185 = vmatpush.msra.mxu0 %v70
    %186 = vmatpush.msra.mxu0 %v69
    %187 = vmatpush.msra.mxu0 %v68
    %188 = vmatpush.msra.mxu0 %v67
    %189 = vmatpush.msra.mxu0 %v66
    %190 = vmatmul.f32.gmra.mxu0 %v15
    %v191 = vpop.f32.mrf.mxu0
    %v192 = vadd.f32 %v172, %v191
    %193 = vdwg.mxu0
    %194 = vmatpush.msra.mxu0 %v97
    %195 = vmatpush.msra.mxu0 %v96
    %196 = vmatpush.msra.mxu0 %v95
    %197 = vmatpush.msra.mxu0 %v94
    %198 = vmatpush.msra.mxu0 %v93
    %199 = vmatpush.msra.mxu0 %v92
    %200 = vmatpush.msra.mxu0 %v91
    %201 = vmatpush.msra.mxu0 %v90
    %202 = vmatpush.msra.mxu0 %v89
    %203 = vmatpush.msra.mxu0 %v88
    %204 = vmatpush.msra.mxu0 %v87
    %205 = vmatpush.msra.mxu0 %v86
    %206 = vmatpush.msra.mxu0 %v85
    %207 = vmatpush.msra.mxu0 %v84
    %208 = vmatpush.msra.mxu0 %v83
    %209 = vmatpush.msra.mxu0 %v82
    %210 = vmatmul.f32.gmra.mxu0 %v16
    %v211 = vpop.f32.mrf.mxu0
    %v212 = vadd.f32 %v192, %v211
    %213 = vdwg.mxu0
    %214 = vmatpush.msra.mxu0 %v113
    %215 = vmatpush.msra.mxu0 %v112
    %216 = vmatpush.msra.mxu0 %v111
    %217 = vmatpush.msra.mxu0 %v110
    %218 = vmatpush.msra.mxu0 %v109
    %219 = vmatpush.msra.mxu0 %v108
    %220 = vmatpush.msra.mxu0 %v107
    %221 = vmatpush.msra.mxu0 %v106
    %222 = vmatpush.msra.mxu0 %v105
    %223 = vmatpush.msra.mxu0 %v104
    %224 = vmatpush.msra.mxu0 %v103
    %225 = vmatpush.msra.mxu0 %v102
    %226 = vmatpush.msra.mxu0 %v101
    %227 = vmatpush.msra.mxu0 %v100
    %228 = vmatpush.msra.mxu0 %v99
    %229 = vmatpush.msra.mxu0 %v98
    %230 = vmatmul.f32.gmra.mxu0 %v17
    %v231 = vpop.f32.mrf.mxu0
    %v232 = vadd.f32 %v212, %v231
    %233 = vdwg.mxu0
    %v234 = vmul.f32 %v12, %v12
    %v235 = vmul.f32 %v13, %v13
    %v236 = vmul.f32 %v14, %v14
    %v237 = vmul.f32 %v15, %v15
    %v238 = vmul.f32 %v16, %v16
    %v239 = vmul.f32 %v17, %v17
    %v240 = vadd.f32 %v234, %v235
    %v241 = vadd.f32 %v240, %v236
    %v242 = vadd.f32 %v241, %v237
    %v243 = vadd.f32 %v242, %v238
    %v244 = vadd.f32 %v243, %v239
    %245 = vadd.xlane.f32.xlu0 %v244
    %v246 = vpop.xlane.xlu0 %245
    %v247 = vmax.f32 %v246, 1e-24
    %v248 = vrsqrt.pop %v247
    %v249 = vmul.f32 %v248, %v247
    %v250 = vmul.f32 %v249, %v248
    %v251 = vmul.f32 0.5, %v250
    %v252 = vsub.f32 1.5, %v251
    %v253 = vmul.f32 %v248, %v252
    %vm254 = vweird.f32 %v247
    %vm255 = vweird.f32 %v248
    %vm256 = vmor %vm254, %vm255
    %v257 = vsel %vm256, %v248, %v253
    %v258 = vmul.f32 %v257, 20.0
    %v259 = vmul.f32 %v232, %v258
    %260 = vst [vmem:[#allocation2] sm:$0xff] %v259
    // Predicated region
    $region10: #{ood_heads_forward.1} parent=1 // pred_check
      _
    $region11: #{ood_heads_forward.1} parent=1 // pred_check_branch
      %262 = sbr.rel (0) target = $region13
    $region12: #{ood_heads_forward.1} parent=1 // pred_region
      %264 = vsyncadd [#allocation3], 0
      %s266 = sshll.u32 [#allocation2], 4
      %s267 = int_to_ptr.vmem [resolvable:$true] %s266
      %s268 = sshll.u32 %s2, 4
      %s269 = int_to_ptr.hbm [resolvable:$true] %s268
      %271 = dma.vmem_to_hbm [thread:$0]  %s267, 128, %s269, [#allocation3]
    $region13: #{ood_heads_forward.1} parent=1 // pred_fallthru
      _
    // Predicated region
    $region14: #{ood_heads_forward.1} parent=1 // pred_check
      _
    $region15: #{ood_heads_forward.1} parent=1 // pred_check_branch
      %273 = sbr.rel (0) target = $region17
    $region16: #{ood_heads_forward.1} parent=1 // pred_region
      %275 = dma.done [#allocation3], 128
    $region17: #{ood_heads_forward.1} parent=1 // pred_fallthru
      _
    %276 = vsyncpa [#allocation3], 1

</llo_original>
